<compile_context>
chip_gen: v7x
topology: tpu7x:2x2x1
jax: 0.10.0
libtpu: 0.0.40
codegen_flags: <defaults>
</compile_context>

<pallas_src>
import functools

import jax
import jax.numpy as jnp
from jax.experimental import pallas as pl
from jax.experimental.pallas import tpu as pltpu


def _round_up(v, m):
    return ((v + m - 1) // m) * m


def _elementwise_prod_kernel(x_ref, w_ref, b_ref, o_ref, *, k, q, qt):
    # One fused MXU matmul per batch tile: (TB, N) @ (N, qt), f32 accumulate.
    y = jnp.dot(x_ref[...], w_ref[...], preferred_element_type=jnp.float32)
    # Bias broadcast (VPU) + sigmoid via EUP exp and approximate EUP reciprocal.
    y = y + b_ref[...]
    y = pl.reciprocal(1.0 + jnp.exp(-y), approx=True)
    # Per-head product: head i lives at lanes [i*q, (i+1)*q). Rolling by i*q and
    # multiplying leaves prod_i y_i in lanes 0..q-1; lanes >= q hold junk and are
    # sliced away by the wrapper. Shift is static and positive.
    acc = y
    for i in range(1, k):
        acc = acc * pltpu.roll(y, shift=(qt - i * q) % qt, axis=1)
    o_ref[...] = acc.astype(o_ref.dtype)


def pack_params(W, b, *, compute_dtype=jnp.bfloat16):
    """Repack stacked (k,N,q) weights / (k,q) biases into lane-packed slabs.

    Call once and cache the result when W/b are reused across forward calls
    (the repack reads/writes the full weight in HBM as a separate XLA op).
    """
    k, N, q = W.shape
    qt = _round_up(k * q, 128)                              # lane-dense packed width
    W2 = jnp.transpose(W, (1, 0, 2)).reshape(N, k * q)      # heads concatenated on lanes
    W2 = jnp.pad(W2, ((0, 0), (0, qt - k * q))).astype(compute_dtype)
    b2 = jnp.pad(b.reshape(1, k * q), ((0, 0), (0, qt - k * q))).astype(jnp.float32)
    return W2, b2


def elementwise_prod_packed(x, W2, b2, *, k, q, compute_dtype=jnp.bfloat16):
    B, N = x.shape
    qt = W2.shape[1]

    # Batch tiling: one block for small B, otherwise 256-row tiles (fits the
    # 32 MiB scoped / 64 MiB physical VMEM budget of v7x with double buffering).
    if B <= 256:
        TB = _round_up(max(B, 1), 16)   # multiple of 16 for bf16 sublane packing
    else:
        TB = 256
    Bp = _round_up(B, TB)
    x_pad = jnp.pad(x, ((0, Bp - B), (0, 0))).astype(compute_dtype)

    # Rough per-step VMEM need: double-buffered inputs/output + y intermediate.
    isz = jnp.dtype(compute_dtype).itemsize
    est = 2 * (TB * N * isz + N * qt * isz + qt * 4 + TB * qt * 4) + TB * qt * 4
    vmem_limit = int(min(max(2 * est, 16 << 20), 48 << 20))

    # TODO(synk): if N ever grows beyond what fits as a resident (TB,N)/(N,qt)
    # slab, add a trailing "arbitrary" N-reduction grid axis with an f32 VMEM
    # accumulator and pl.when init/finalize.
    out_padded = pl.pallas_call(
        functools.partial(_elementwise_prod_kernel, k=k, q=q, qt=qt),
        out_shape=jax.ShapeDtypeStruct((Bp, qt), jnp.float32),
        grid=(Bp // TB,),
        in_specs=[
            pl.BlockSpec((TB, N), lambda i: (i, 0)),   # x tile, streamed over B
            pl.BlockSpec((N, qt), lambda i: (0, 0)),   # packed weights (resident)
            pl.BlockSpec((1, qt), lambda i: (0, 0)),   # packed bias (resident)
        ],
        out_specs=pl.BlockSpec((TB, qt), lambda i: (i, 0)),
        compiler_params=pltpu.CompilerParams(
            dimension_semantics=("parallel",),          # shard B across v7x's 2 TCs
            vmem_limit_bytes=vmem_limit,
        ),
    )(x_pad, W2, b2)

    return out_padded[:B, :q]


def elementwise_prod(x, W, b, *, compute_dtype=jnp.bfloat16):
    """x: (B, N), W: (k, N, q), b: (k, q) -> (B, q). Matches ElementwiseProd.forward."""
    k, _, q = W.shape
    W2, b2 = pack_params(W, b, compute_dtype=compute_dtype)
    return elementwise_prod_packed(x, W2, b2, k=k, q=q, compute_dtype=compute_dtype)


def elementwise_prod_ref(x, W, b):
    outs = [jax.nn.sigmoid(x @ W[i] + b[i]) for i in range(W.shape[0])]
    prod = outs[0]
    for o in outs[1:]:
        prod = prod * o
    return prod


if __name__ == "__main__":
    # Module config (small): N=32 input features, q=16 outputs per head, k=3 heads.
    B, N, q, k = 8, 32, 16, 3

    key = jax.random.PRNGKey(0)
    kx, kw, kb = jax.random.split(key, 3)

    x = jax.random.normal(kx, (B, N), dtype=jnp.float32)
    W = jax.random.normal(kw, (k, N, q), dtype=jnp.float32)   # stacked W[i] (N, q)
    b = jax.random.normal(kb, (k, q), dtype=jnp.float32)      # stacked b[i] (q,)

    out = jax.block_until_ready(elementwise_prod(x, W, b))
    ref = elementwise_prod_ref(x, W, b)

    assert out.shape == (B, q)
    # bf16 matmul inputs + approximate EUP reciprocal -> loosened tolerance vs f32 ref.
    assert jnp.allclose(out, ref, atol=5e-2, rtol=5e-2), "mismatch vs reference"

    print("KERNEL_OK")
</pallas_src>

<mosaic_0001>
module attributes {stable_mosaic.version = 11 : i64} {
  func.func @_elementwise_prod_kernel(%arg0: i32, %arg1: memref<16x32xbf16, #tpu.memory_space<vmem>>, %arg2: memref<32x128xbf16, #tpu.memory_space<vmem>>, %arg3: memref<1x128xf32, #tpu.memory_space<vmem>>, %arg4: memref<16x128xf32, #tpu.memory_space<vmem>>) attributes {dimension_semantics = [#tpu.dimension_semantics<parallel>], iteration_bounds = array<i64: 1>, scalar_prefetch = 0 : i64, scratch_operands = 0 : i64, tpu.core_type = #tpu.core_type<tc>, window_params = [{transform_indices = @transform_0, window_bounds = array<i64: 16, 32>}, {pipeline_mode = #tpu.pipeline_mode<synchronous>, transform_indices = @transform_1, window_bounds = array<i64: 32, 128>}, {pipeline_mode = #tpu.pipeline_mode<synchronous>, transform_indices = @transform_2, window_bounds = array<i64: 1, 128>}, {transform_indices = @transform_3, window_bounds = array<i64: 16, 128>}]} {
    %c0 = arith.constant 0 : index
    %c0_0 = arith.constant 0 : index
    %0 = vector.load %arg1[%c0, %c0_0] : memref<16x32xbf16, #tpu.memory_space<vmem>>, vector<16x32xbf16>
    %c0_1 = arith.constant 0 : index
    %c0_2 = arith.constant 0 : index
    %1 = vector.load %arg2[%c0_1, %c0_2] : memref<32x128xbf16, #tpu.memory_space<vmem>>, vector<32x128xbf16>
    %cst = arith.constant dense<0.000000e+00> : vector<16x128xf32>
    %2 = tpu.matmul %0, %1, %cst {dimension_numbers = #tpu.dot_dimension_numbers<[1], [0], [0], [1], [0, 0, 1, 1], [], []>} : vector<16x32xbf16>, vector<32x128xbf16>, vector<16x128xf32> -> vector<16x128xf32>
    %c0_3 = arith.constant 0 : index
    %c0_4 = arith.constant 0 : index
    %3 = vector.load %arg3[%c0_3, %c0_4] : memref<1x128xf32, #tpu.memory_space<vmem>>, vector<1x128xf32>
    %4 = vector.broadcast %3 : vector<1x128xf32> to vector<16x128xf32>
    %5 = arith.addf %2, %4 : vector<16x128xf32>
    %cst_5 = arith.constant 0.000000e+00 : f32
    %6 = vector.broadcast %cst_5 : f32 to vector<16x128xf32>
    %7 = arith.subf %6, %5 : vector<16x128xf32>
    %8 = math.exp %7 : vector<16x128xf32>
    %cst_6 = arith.constant 1.000000e+00 : f32
    %9 = vector.broadcast %cst_6 : f32 to vector<16x128xf32>
    %10 = arith.addf %9, %8 : vector<16x128xf32>
    %11 = tpu.reciprocal %10 {approx = true} : vector<16x128xf32> -> vector<16x128xf32>
    %c112_i32 = arith.constant 112 : i32
    %12 = tpu.dynamic_rotate %11 by %c112_i32 dim 1 : vector<16x128xf32>, i32 -> vector<16x128xf32>
    %13 = arith.mulf %11, %12 : vector<16x128xf32>
    %c96_i32 = arith.constant 96 : i32
    %14 = tpu.dynamic_rotate %11 by %c96_i32 dim 1 : vector<16x128xf32>, i32 -> vector<16x128xf32>
    %15 = arith.mulf %13, %14 : vector<16x128xf32>
    %c0_7 = arith.constant 0 : index
    %c0_8 = arith.constant 0 : index
    %16 = vector.load %arg4[%c0_7, %c0_8] : memref<16x128xf32, #tpu.memory_space<vmem>>, vector<16x128xf32>
    tpu.vector_store %arg4[%c0_7, %c0_8], %15 {strides = array<i32>} : memref<16x128xf32, #tpu.memory_space<vmem>>, vector<16x128xf32>,
    return
  }
  func.func @transform_0(%arg0: i32) -> (i32, i32) {
    %c0_i32 = arith.constant 0 : i32
    %c0_i32_0 = arith.constant 0 : i32
    return %arg0, %c0_i32 : i32, i32
  }
  func.func @transform_1(%arg0: i32) -> (i32, i32) {
    %c0_i32 = arith.constant 0 : i32
    %c0_i32_0 = arith.constant 0 : i32
    %c0_i32_1 = arith.constant 0 : i32
    return %c0_i32, %c0_i32_0 : i32, i32
  }
  func.func @transform_2(%arg0: i32) -> (i32, i32) {
    %c0_i32 = arith.constant 0 : i32
    %c0_i32_0 = arith.constant 0 : i32
    %c0_i32_1 = arith.constant 0 : i32
    return %c0_i32, %c0_i32_0 : i32, i32
  }
  func.func @transform_3(%arg0: i32) -> (i32, i32) {
    %c0_i32 = arith.constant 0 : i32
    %c0_i32_0 = arith.constant 0 : i32
    return %arg0, %c0_i32 : i32, i32
  }
}

</mosaic_0001>

<llo_original>
// kernel: tpu_custom_call.1
$region0: #{tpu_custom_call.1}
  #allocation0 [shape = 'u32[]', space=smem, size = 0x4, offset = 0x4, fixed_abs, tag = 'smem constant byte address 0x4 - core index']
  #allocation1 [shape = 'u32[144,128]{1,0:T(1,128)}', space=vmem, size = 0x12000, scoped, tag = 'internal scratch']
  %s0 = inlined_call_operand.hbm [shape: bf16[16,32], index: 0, kind: input, shape index: {}]
  %s1 = inlined_call_operand.hbm [shape: bf16[32,128], index: 1, kind: input, shape index: {}]
  %s2 = inlined_call_operand.vmem [shape: f32[1,128], index: 2, kind: input, shape index: {}]
  %s3 = inlined_call_operand.hbm [shape: f32[16,128], index: 3, kind: output, shape index: {}]
  %s4 = sld [smem:[#allocation0]]
  $region30: #{tpu_custom_call.1} parent=0
    _
  %s6 = ssub.s32 1, %s4
  %s7 = scalar_select 0, %s6, %s4
  $region1: #{tpu_custom_call.1} parent=0
    #allocation2 [shape = 'u8[4096]{0}', space=vmem, size = 0x1000, scoped, tag = 'input window, operand 0, single buffered']
    #allocation3 [shape = 's32[1]{0}', space=sflag, size = 0x4, scoped, tag = 'scoped memory for tpu_custom_call.1']
    #allocation4 [shape = 's32[1]{0}', space=sflag, size = 0x4, scoped, tag = 'scoped memory for tpu_custom_call.1']
    #allocation5 [shape = 'u8[8192]{0}', space=vmem, size = 0x2000, scoped, tag = 'input window, operand 1, single buffered']
    #allocation6 [shape = 's32[1]{0}', space=sflag, size = 0x4, scoped, tag = 'scoped memory for tpu_custom_call.1']
    #allocation7 [shape = 'u8[8192]{0}', space=vmem, size = 0x2000, scoped, tag = 'output window, operand 0, single buffered']
    %8 = vsyncpa [#allocation3], 0
    %9 = vsyncpa [#allocation6], 0
    %10 = vsyncpa [#allocation4], 0
    // Predicated region
    $region2: #{tpu_custom_call.1} parent=1 // pred_check
      _
    $region3: #{tpu_custom_call.1} parent=1 // pred_check_branch
      %12 = sbr.rel (0) target = $region5
    $region4: #{tpu_custom_call.1} parent=1 // pred_region
      %s14 = ssub.s32 128, 128
      %15 = vsyncadd [#allocation3], %s14
      %s16 = sshll.u32 [#allocation2], 4
      %s17 = int_to_ptr.vmem [resolvable:$true] %s16
      %22 = dma.hbm_to_vmem [thread:$0]  %s0, 128, %s17, [#allocation3], 64, 64, 4
    $region5: #{tpu_custom_call.1} parent=1 // pred_fallthru
      _
    // Predicated region
    $region6: #{tpu_custom_call.1} parent=1 // pred_check
      _
    $region7: #{tpu_custom_call.1} parent=1 // pred_check_branch
      %24 = sbr.rel (0) target = $region9
    $region8: #{tpu_custom_call.1} parent=1 // pred_region
      %s26 = ssub.s32 256, 256
      %27 = vsyncadd [#allocation6], %s26
      %s28 = sshll.u32 [#allocation5], 4
      %s29 = int_to_ptr.vmem [resolvable:$true] %s28
      %34 = dma.hbm_to_vmem [thread:$0]  %s1, 256, %s29, [#allocation6], 64, 64, 4
    $region9: #{tpu_custom_call.1} parent=1 // pred_fallthru
      _
    // Predicated region
    $region10: #{tpu_custom_call.1} parent=1 // pred_check
      _
    $region11: #{tpu_custom_call.1} parent=1 // pred_check_branch
      %36 = sbr.rel (0) target = $region13
    $region12: #{tpu_custom_call.1} parent=1 // pred_region
      _
    $region13: #{tpu_custom_call.1} parent=1 // pred_fallthru
      _
    // Predicated region
    $region14: #{tpu_custom_call.1} parent=1 // pred_check
      _
    $region15: #{tpu_custom_call.1} parent=1 // pred_check_branch
      %38 = sbr.rel (0) target = $region17
    $region16: #{tpu_custom_call.1} parent=1 // pred_region
      %39 = dma.done [#allocation3], 128
    $region17: #{tpu_custom_call.1} parent=1 // pred_fallthru
      _
    // Predicated region
    $region18: #{tpu_custom_call.1} parent=1 // pred_check
      _
    $region19: #{tpu_custom_call.1} parent=1 // pred_check_branch
      %41 = sbr.rel (0) target = $region21
    $region20: #{tpu_custom_call.1} parent=1 // pred_region
      %42 = dma.done [#allocation6], 256
    $region21: #{tpu_custom_call.1} parent=1 // pred_fallthru
      _
    %v44 = vld [vmem:[#allocation2] sm:$0xf]
    %v45 = vld [vmem:[#allocation2 + $0x4] sm:$0xf]
    %v46 = vld [vmem:[#allocation5] sm:$0xf]
    %v47 = vld [vmem:[#allocation5 + $0x4] sm:$0xf]
    %v48 = vld [vmem:[#allocation5 + $0x8] sm:$0xf]
    %v49 = vld [vmem:[#allocation5 + $0xc] sm:$0xf]
    %v50 = vld [vmem:[%s2] sm:$0x1]
    %v52 = vlaneseq
    %v53 = vshrl.u32 %v52, 7
    %v54 = vsub.s32 0, %v53
    %v55 = vrot.slane %v50, %v54
    %v59 = vunpack.c.l.b16 %v44
    %v60 = vunpack.c.l.b16 %v45
    %v61 = vpack.c.b16 %v60, %v59
    %v66 = vunpack.c.l.b16 %v46
    %v67 = vunpack.c.l.b16 %v47
    %v68 = vunpack.c.l.b16 %v48
    %v69 = vunpack.c.l.b16 %v49
    %v70 = vpack.c.b16 %v67, %v66
    %v71 = vpack.c.b16 %v69, %v68
    %vm74 = vcmask 261120
    %v76 = vsel %vm74, %v61, 0
    %78 = vmatprep.subr.bf16.mxu0 0
    %79 = vmatpush1.bf16.msra.mxu0 %v70
    %80 = vmatprep.subr.bf16.mxu0 0
    %81 = vmatpush1.bf16.msra.mxu0 %v71
    %82 = vmatprep.subr.bf16.mxu0 0
    %83 = vmatpush1.bf16.msra.mxu0 0
    %84 = vmatprep.subr.bf16.mxu0 0
    %85 = vmatpush1.bf16.msra.mxu0 0
    %86 = vmatprep.subr.bf16.mxu0 0
    %87 = vmatpush1.bf16.msra.mxu0 0
    %88 = vmatprep.subr.bf16.mxu0 0
    %89 = vmatpush1.bf16.msra.mxu0 0
    %90 = vmatprep.subr.bf16.mxu0 0
    %91 = vmatpush1.bf16.msra.mxu0 0
    %92 = vmatprep.subr.bf16.mxu0 0
    %93 = vmatpush1.bf16.msra.mxu0 0
    %94 = vmatprep.subr.bf16.mxu0 0
    %95 = vmatpush1.bf16.msra.mxu0 0
    %96 = vmatprep.subr.bf16.mxu0 0
    %97 = vmatpush1.bf16.msra.mxu0 0
    %98 = vmatprep.subr.bf16.mxu0 0
    %99 = vmatpush1.bf16.msra.mxu0 0
    %100 = vmatprep.subr.bf16.mxu0 0
    %101 = vmatpush1.bf16.msra.mxu0 0
    %102 = vmatprep.subr.bf16.mxu0 0
    %103 = vmatpush1.bf16.msra.mxu0 0
    %104 = vmatprep.subr.bf16.mxu0 0
    %105 = vmatpush1.bf16.msra.mxu0 0
    %106 = vmatprep.subr.bf16.mxu0 0
    %107 = vmatpush1.bf16.msra.mxu0 0
    %108 = vmatprep.subr.bf16.mxu0 0
    %109 = vmatpush1.bf16.msra.mxu0 0
    %110 = vmatprep.mubr.bf16.mxu0 0
    %111 = vmatmul.mubr.bf16.gmra.mrb[0].mxu0 %v76
    %v112 = vpop.f32.mrb[0].mxu0
    %v113 = vadd.f32 %v55, %v112
    %v114 = vpop.f32.mrb[0].mxu0
    %v115 = vpop.f32.mrb[0].mxu0
    %v116 = vadd.f32 %v55, %v115
    %v117 = vpop.f32.mrb[0].mxu0
    %118 = vdwg.mxu0
    %v119 = vsub.f32 0.0, %v113
    %v120 = vsub.f32 0.0, %v116
    %v121 = vmul.f32 %v119, 1.442695
    %v122 = vpow.pop %v121
    %v123 = vmul.f32 %v120, 1.442695
    %v124 = vpow.pop %v123
    %v125 = vadd.f32 %v122, 1.0
    %v126 = vadd.f32 %v124, 1.0
    %v127 = vrcp.pop %v125
    %v128 = vrcp.pop %v126
    %129 = vrot.lane.b32.xlu0 %v127, 112
    %v130 = vpop.permute.xlu0 %129
    %131 = vrot.lane.b32.xlu0 %v128, 112
    %v132 = vpop.permute.xlu0 %131
    %v133 = vmul.f32 %v127, %v130
    %v134 = vmul.f32 %v128, %v132
    %135 = vrot.lane.b32.xlu0 %v127, 96
    %v136 = vpop.permute.xlu0 %135
    %137 = vrot.lane.b32.xlu0 %v128, 96
    %v138 = vpop.permute.xlu0 %137
    %v139 = vmul.f32 %v133, %v136
    %v140 = vmul.f32 %v134, %v138
    %141 = vst [vmem:[#allocation7] sm:$0xff] %v139
    %142 = vst [vmem:[#allocation7 + $0x8] sm:$0xff] %v140
    // Predicated region
    $region22: #{tpu_custom_call.1} parent=1 // pred_check
      _
    $region23: #{tpu_custom_call.1} parent=1 // pred_check_branch
      %144 = sbr.rel (0) target = $region25
    $region24: #{tpu_custom_call.1} parent=1 // pred_region
      %s146 = ssub.s32 256, 256
      %147 = vsyncadd [#allocation4], %s146
      %s148 = sshll.u32 [#allocation7], 4
      %s149 = int_to_ptr.vmem [resolvable:$true] %s148
      %154 = dma.vmem_to_hbm [thread:$0]  %s149, 256, %s3, [#allocation4], 128, 128, 8
    $region25: #{tpu_custom_call.1} parent=1 // pred_fallthru
      _
    // Predicated region
    $region26: #{tpu_custom_call.1} parent=1 // pred_check
      _
    $region27: #{tpu_custom_call.1} parent=1 // pred_check_branch
      %156 = sbr.rel (0) target = $region29
    $region28: #{tpu_custom_call.1} parent=1 // pred_region
      %157 = dma.done [#allocation4], 256
    $region29: #{tpu_custom_call.1} parent=1 // pred_fallthru
      _
    %158 = vsyncpa [#allocation3], 1
    %159 = vsyncpa [#allocation6], 1
    %160 = vsyncpa [#allocation4], 1

</llo_original>
